<compile_context>
chip_gen: v6e
topology: v6e:2x2x1
jax: 0.10.0
libtpu: 0.0.40
codegen_flags: <defaults>
</compile_context>

<pallas_src>
import jax
import jax.numpy as jnp
from jax.experimental import pallas as pl
from jax.experimental.pallas import tpu as pltpu


def _round_up(x, m):
    return ((x + m - 1) // m) * m


def _lane_pad(dim):
    # 256-wide tiles feed v6e/v7x's 2x256x256 MXU at full width; for small dims
    # the extra zero-padding would dominate, so stay at the 128-lane minimum.
    align = 256 if dim >= 256 else 128
    return _round_up(dim, align)


# -----------------------------------------------------------------------------
# Kernel: one batch tile of the fused 3-layer MLP.  Padded hidden/action lanes
# see zero weights + zero bias, so relu/tanh keep them at exactly 0.
# -----------------------------------------------------------------------------
def actor_kernel(x_ref, w1_ref, b1_ref, w2_ref, b2_ref, w3_ref, b3_ref, o_ref):
    wdt = w2_ref.dtype  # MXU operand dtype for layers 2/3 (bf16 or f32)
    # linear1 -> relu  (K = n_states is tiny; w1 is upcast to f32 if bf16)
    h1 = jnp.dot(x_ref[...], w1_ref[...], preferred_element_type=jnp.float32)
    h1 = jnp.maximum(h1 + b1_ref[...], 0.0).astype(wdt)
    # linear2 -> relu
    h2 = jnp.dot(h1, w2_ref[...], preferred_element_type=jnp.float32)
    h2 = jnp.maximum(h2 + b2_ref[...], 0.0).astype(wdt)
    # linear3 -> tanh
    h3 = jnp.dot(h2, w3_ref[...], preferred_element_type=jnp.float32)
    o_ref[...] = jnp.tanh(h3 + b3_ref[...]).astype(o_ref.dtype)


# -----------------------------------------------------------------------------
# One-time parameter prep (do NOT call per forward).
# -----------------------------------------------------------------------------
def prepare_actor_params(params, weight_dtype=jnp.bfloat16):
    """Pad hidden/action feature dims to lane-dense widths and cast weights to
    `weight_dtype` (biases stay f32; they are added to the f32 accumulator).
    Call once at init / after each optimizer step."""
    w1, b1 = params["w1"], params["b1"]
    w2, b2 = params["w2"], params["b2"]
    w3, b3 = params["w3"], params["b3"]
    n_states, hidden_dim = w1.shape
    n_actions = w3.shape[1]
    Hp = _lane_pad(hidden_dim)
    Ap = _lane_pad(n_actions)
    f32 = jnp.float32
    return {
        "w1": jnp.pad(w1, ((0, 0), (0, Hp - hidden_dim))).astype(weight_dtype),
        "b1": jnp.pad(b1, ((0, 0), (0, Hp - hidden_dim))).astype(f32),
        "w2": jnp.pad(w2, ((0, Hp - hidden_dim), (0, Hp - hidden_dim))).astype(weight_dtype),
        "b2": jnp.pad(b2, ((0, 0), (0, Hp - hidden_dim))).astype(f32),
        "w3": jnp.pad(w3, ((0, Hp - hidden_dim), (0, Ap - n_actions))).astype(weight_dtype),
        "b3": jnp.pad(b3, ((0, 0), (0, Ap - n_actions))).astype(f32),
        "n_states": int(n_states),
        "hidden_dim": int(hidden_dim),
        "n_actions": int(n_actions),
    }


# -----------------------------------------------------------------------------
# Forward wrapper.
# -----------------------------------------------------------------------------
def actor_forward(x, prepped, tile_b=256, return_padded=False):
    """Fused Actor forward.  `prepped` comes from prepare_actor_params()."""
    w1, b1 = prepped["w1"], prepped["b1"]
    w2, b2 = prepped["w2"], prepped["b2"]
    w3, b3 = prepped["w3"], prepped["b3"]
    n_actions = prepped["n_actions"]

    B, n_states = x.shape
    assert n_states == prepped["n_states"]
    Hp = w1.shape[1]
    Ap = w3.shape[1]

    # ---- batch tiling: minimize padding, and force >=2 grid steps (when the
    # batch is big enough to split) so the "parallel" axis spans both v7x TCs.
    n_tiles = pl.cdiv(B, tile_b)
    if B > 8:
        n_tiles = max(n_tiles, 2)
    tb = _round_up(pl.cdiv(B, n_tiles), 8)
    B_pad = tb * n_tiles
    xp = jnp.pad(x, ((0, B_pad - B), (0, 0))) if B_pad != B else x

    # ---- resident weight/bias specs: constant index_map keeps them in VMEM
    # across the whole grid.  Once big enough to matter, request
    # single-buffering (block index never changes -> double-buffer is waste).
    resident_bytes = sum(int(a.size) * a.dtype.itemsize
                         for a in (w1, b1, w2, b2, w3, b3))
    single_buffer = resident_bytes > (2 << 20)
    if single_buffer:
        def resident(shape):
            return pl.BlockSpec(shape, lambda i: (0, 0),
                                pipeline_mode=pl.Buffered(1))
        n_resident_buf = 1
    else:
        def resident(shape):
            return pl.BlockSpec(shape, lambda i: (0, 0))
        n_resident_buf = 2

    # Size the scoped-VMEM budget from the actual footprint (v5e defaults to
    # only 16 MiB); harmless no-op when the estimate is below the default.
    tile_bytes = (tb * n_states + tb * Ap) * 4 * 2  # double-buffered x + out, f32
    vmem_limit = resident_bytes * n_resident_buf + tile_bytes + (4 << 20)
    vmem_limit = int(min(max(vmem_limit, 32 << 20), 128 << 20))

    out_padded = pl.pallas_call(
        actor_kernel,
        out_shape=jax.ShapeDtypeStruct((B_pad, Ap), jnp.float32),
        grid=(n_tiles,),
        in_specs=[
            pl.BlockSpec((tb, n_states), lambda i: (i, 0)),  # x: tiled over batch
            resident((n_states, Hp)),                        # w1
            resident((1, Hp)),                               # b1
            resident((Hp, Hp)),                              # w2
            resident((1, Hp)),                               # b2
            resident((Hp, Ap)),                              # w3
            resident((1, Ap)),                               # b3
        ],
        out_specs=pl.BlockSpec((tb, Ap), lambda i: (i, 0)),
        compiler_params=pltpu.CompilerParams(
            dimension_semantics=("parallel",),   # batch axis -> both v7x TCs
            vmem_limit_bytes=vmem_limit,
        ),
    )(xp, w1, b1, w2, b2, w3, b3)

    if return_padded:
        # (B_pad, Ap) padded layout: lets a fused downstream consumer skip the
        # extra HBM copy that the slice below would materialize.
        return out_padded
    return out_padded[:B, :n_actions]


def init_actor_params(key, n_states, n_actions, hidden_dim, init_w=0.003):
    """Mirrors the PyTorch module: linear1/linear2 use U(-1/sqrt(fan_in),
    1/sqrt(fan_in)) (PyTorch default), linear3 uses U(-init_w, init_w).
    Weights stored transposed: (in_features, out_features)."""
    k1, k2, k3, k4, k5, k6 = jax.random.split(key, 6)
    b1 = 1.0 / jnp.sqrt(n_states)
    b2 = 1.0 / jnp.sqrt(hidden_dim)
    return {
        "w1": jax.random.uniform(k1, (n_states, hidden_dim), jnp.float32, -b1, b1),
        "b1": jax.random.uniform(k2, (1, hidden_dim), jnp.float32, -b1, b1),
        "w2": jax.random.uniform(k3, (hidden_dim, hidden_dim), jnp.float32, -b2, b2),
        "b2": jax.random.uniform(k4, (1, hidden_dim), jnp.float32, -b2, b2),
        "w3": jax.random.uniform(k5, (hidden_dim, n_actions), jnp.float32, -init_w, init_w),
        "b3": jax.random.uniform(k6, (1, n_actions), jnp.float32, -init_w, init_w),
    }


def _reference(x, params):
    h = jnp.maximum(x @ params["w1"] + params["b1"], 0.0)
    h = jnp.maximum(h @ params["w2"] + params["b2"], 0.0)
    return jnp.tanh(h @ params["w3"] + params["b3"])


if __name__ == "__main__":
    key = jax.random.PRNGKey(0)
    n_states, n_actions, hidden_dim = 8, 4, 32

    pkey, xkey, xkey2 = jax.random.split(key, 3)
    params = init_actor_params(pkey, n_states, n_actions, hidden_dim)
    prepped = prepare_actor_params(params)  # one-time prep (bf16 weights)

    # Small shape consistent with the module (single grid step).
    batch = 2
    x = jax.random.normal(xkey, (batch, n_states), jnp.float32)
    out = jax.block_until_ready(actor_forward(x, prepped))
    assert out.shape == (batch, n_actions)
    assert jnp.allclose(out, _reference(x, params), atol=1e-2), \
        "mismatch vs reference (small batch, bf16 weights)"

    # Larger batch: exercises minimal-padding tile selection (300 -> 2x152=304)
    # and the >=2-step parallel grid.
    batch2 = 300
    x2 = jax.random.normal(xkey2, (batch2, n_states), jnp.float32)
    out2 = jax.block_until_ready(actor_forward(x2, prepped))
    assert out2.shape == (batch2, n_actions)
    assert jnp.allclose(out2, _reference(x2, params), atol=1e-2), \
        "mismatch vs reference (large batch, bf16 weights)"

    # f32 weight path stays bit-accurate to the reference.
    prepped_f32 = prepare_actor_params(params, weight_dtype=jnp.float32)
    out3 = jax.block_until_ready(actor_forward(x2, prepped_f32))
    assert jnp.allclose(out3, _reference(x2, params), atol=1e-5), \
        "mismatch vs reference (f32 weights)"

    print("KERNEL_OK")
</pallas_src>

<mosaic_0001>
module attributes {stable_mosaic.version = 11 : i64} {
  func.func @actor_kernel(%arg0: i32, %arg1: memref<8x8xf32, #tpu.memory_space<vmem>>, %arg2: memref<8x128xbf16, #tpu.memory_space<vmem>>, %arg3: memref<1x128xf32, #tpu.memory_space<vmem>>, %arg4: memref<128x128xbf16, #tpu.memory_space<vmem>>, %arg5: memref<1x128xf32, #tpu.memory_space<vmem>>, %arg6: memref<128x128xbf16, #tpu.memory_space<vmem>>, %arg7: memref<1x128xf32, #tpu.memory_space<vmem>>, %arg8: memref<8x128xf32, #tpu.memory_space<vmem>>) attributes {dimension_semantics = [#tpu.dimension_semantics<parallel>], iteration_bounds = array<i64: 1>, scalar_prefetch = 0 : i64, scratch_operands = 0 : i64, tpu.core_type = #tpu.core_type<tc>, window_params = [{transform_indices = @transform_0, window_bounds = array<i64: 8, 8>}, {pipeline_mode = #tpu.pipeline_mode<synchronous>, transform_indices = @transform_1, window_bounds = array<i64: 8, 128>}, {pipeline_mode = #tpu.pipeline_mode<synchronous>, transform_indices = @transform_2, window_bounds = array<i64: 1, 128>}, {pipeline_mode = #tpu.pipeline_mode<synchronous>, transform_indices = @transform_3, window_bounds = array<i64: 128, 128>}, {pipeline_mode = #tpu.pipeline_mode<synchronous>, transform_indices = @transform_4, window_bounds = array<i64: 1, 128>}, {pipeline_mode = #tpu.pipeline_mode<synchronous>, transform_indices = @transform_5, window_bounds = array<i64: 128, 128>}, {pipeline_mode = #tpu.pipeline_mode<synchronous>, transform_indices = @transform_6, window_bounds = array<i64: 1, 128>}, {transform_indices = @transform_7, window_bounds = array<i64: 8, 128>}]} {
    %c0 = arith.constant 0 : index
    %c0_0 = arith.constant 0 : index
    %0 = vector.load %arg1[%c0, %c0_0] : memref<8x8xf32, #tpu.memory_space<vmem>>, vector<8x8xf32>
    %c0_1 = arith.constant 0 : index
    %c0_2 = arith.constant 0 : index
    %1 = vector.load %arg2[%c0_1, %c0_2] : memref<8x128xbf16, #tpu.memory_space<vmem>>, vector<8x128xbf16>
    %cst = arith.constant dense<0.000000e+00> : vector<8x128xf32>
    %2 = tpu.matmul %0, %1, %cst {dimension_numbers = #tpu.dot_dimension_numbers<[1], [0], [0], [1], [0, 0, 1, 1], [], []>} : vector<8x8xf32>, vector<8x128xbf16>, vector<8x128xf32> -> vector<8x128xf32>
    %c0_3 = arith.constant 0 : index
    %c0_4 = arith.constant 0 : index
    %3 = vector.load %arg3[%c0_3, %c0_4] : memref<1x128xf32, #tpu.memory_space<vmem>>, vector<1x128xf32>
    %4 = vector.broadcast %3 : vector<1x128xf32> to vector<8x128xf32>
    %5 = arith.addf %2, %4 : vector<8x128xf32>
    %cst_5 = arith.constant 0.000000e+00 : f32
    %6 = vector.broadcast %cst_5 : f32 to vector<8x128xf32>
    %7 = arith.maximumf %5, %6 : vector<8x128xf32>
    %8 = arith.truncf %7 : vector<8x128xf32> to vector<8x128xbf16>
    %c0_6 = arith.constant 0 : index
    %c0_7 = arith.constant 0 : index
    %9 = vector.load %arg4[%c0_6, %c0_7] : memref<128x128xbf16, #tpu.memory_space<vmem>>, vector<128x128xbf16>
    %cst_8 = arith.constant dense<0.000000e+00> : vector<8x128xf32>
    %10 = tpu.matmul %8, %9, %cst_8 {dimension_numbers = #tpu.dot_dimension_numbers<[1], [0], [0], [1], [0, 0, 1, 1], [], []>} : vector<8x128xbf16>, vector<128x128xbf16>, vector<8x128xf32> -> vector<8x128xf32>
    %c0_9 = arith.constant 0 : index
    %c0_10 = arith.constant 0 : index
    %11 = vector.load %arg5[%c0_9, %c0_10] : memref<1x128xf32, #tpu.memory_space<vmem>>, vector<1x128xf32>
    %12 = vector.broadcast %11 : vector<1x128xf32> to vector<8x128xf32>
    %13 = arith.addf %10, %12 : vector<8x128xf32>
    %cst_11 = arith.constant 0.000000e+00 : f32
    %14 = vector.broadcast %cst_11 : f32 to vector<8x128xf32>
    %15 = arith.maximumf %13, %14 : vector<8x128xf32>
    %16 = arith.truncf %15 : vector<8x128xf32> to vector<8x128xbf16>
    %c0_12 = arith.constant 0 : index
    %c0_13 = arith.constant 0 : index
    %17 = vector.load %arg6[%c0_12, %c0_13] : memref<128x128xbf16, #tpu.memory_space<vmem>>, vector<128x128xbf16>
    %cst_14 = arith.constant dense<0.000000e+00> : vector<8x128xf32>
    %18 = tpu.matmul %16, %17, %cst_14 {dimension_numbers = #tpu.dot_dimension_numbers<[1], [0], [0], [1], [0, 0, 1, 1], [], []>} : vector<8x128xbf16>, vector<128x128xbf16>, vector<8x128xf32> -> vector<8x128xf32>
    %c0_15 = arith.constant 0 : index
    %c0_16 = arith.constant 0 : index
    %19 = vector.load %arg7[%c0_15, %c0_16] : memref<1x128xf32, #tpu.memory_space<vmem>>, vector<1x128xf32>
    %20 = vector.broadcast %19 : vector<1x128xf32> to vector<8x128xf32>
    %21 = arith.addf %18, %20 : vector<8x128xf32>
    %22 = math.tanh %21 : vector<8x128xf32>
    %c0_17 = arith.constant 0 : index
    %c0_18 = arith.constant 0 : index
    %23 = vector.load %arg8[%c0_17, %c0_18] : memref<8x128xf32, #tpu.memory_space<vmem>>, vector<8x128xf32>
    tpu.vector_store %arg8[%c0_17, %c0_18], %22 {strides = array<i32>} : memref<8x128xf32, #tpu.memory_space<vmem>>, vector<8x128xf32>,
    return
  }
  func.func @transform_0(%arg0: i32) -> (i32, i32) {
    %c0_i32 = arith.constant 0 : i32
    %c0_i32_0 = arith.constant 0 : i32
    return %arg0, %c0_i32 : i32, i32
  }
  func.func @transform_1(%arg0: i32) -> (i32, i32) {
    %c0_i32 = arith.constant 0 : i32
    %c0_i32_0 = arith.constant 0 : i32
    %c0_i32_1 = arith.constant 0 : i32
    return %c0_i32, %c0_i32_0 : i32, i32
  }
  func.func @transform_2(%arg0: i32) -> (i32, i32) {
    %c0_i32 = arith.constant 0 : i32
    %c0_i32_0 = arith.constant 0 : i32
    %c0_i32_1 = arith.constant 0 : i32
    return %c0_i32, %c0_i32_0 : i32, i32
  }
  func.func @transform_3(%arg0: i32) -> (i32, i32) {
    %c0_i32 = arith.constant 0 : i32
    %c0_i32_0 = arith.constant 0 : i32
    %c0_i32_1 = arith.constant 0 : i32
    return %c0_i32, %c0_i32_0 : i32, i32
  }
  func.func @transform_4(%arg0: i32) -> (i32, i32) {
    %c0_i32 = arith.constant 0 : i32
    %c0_i32_0 = arith.constant 0 : i32
    %c0_i32_1 = arith.constant 0 : i32
    return %c0_i32, %c0_i32_0 : i32, i32
  }
  func.func @transform_5(%arg0: i32) -> (i32, i32) {
    %c0_i32 = arith.constant 0 : i32
    %c0_i32_0 = arith.constant 0 : i32
    %c0_i32_1 = arith.constant 0 : i32
    return %c0_i32, %c0_i32_0 : i32, i32
  }
  func.func @transform_6(%arg0: i32) -> (i32, i32) {
    %c0_i32 = arith.constant 0 : i32
    %c0_i32_0 = arith.constant 0 : i32
    %c0_i32_1 = arith.constant 0 : i32
    return %c0_i32, %c0_i32_0 : i32, i32
  }
  func.func @transform_7(%arg0: i32) -> (i32, i32) {
    %c0_i32 = arith.constant 0 : i32
    %c0_i32_0 = arith.constant 0 : i32
    return %arg0, %c0_i32 : i32, i32
  }
}

</mosaic_0001>

<llo_original>
// kernel: tpu_custom_call.1
$region0: #{tpu_custom_call.1}
  #allocation0 [shape = 'u32[]', space=smem, size = 0x4, offset = 0x4, fixed_abs, tag = 'smem constant byte address 0x4 - core index']
  #allocation1 [shape = 'u32[144,128]{1,0:T(1,128)}', space=vmem, size = 0x12000, scoped, tag = 'internal scratch']
  %s0 = inlined_call_operand.hbm [shape: f32[8,8], index: 0, kind: input, shape index: {}]
  %s1 = inlined_call_operand.hbm [shape: bf16[8,128], index: 1, kind: input, shape index: {}]
  %s2 = inlined_call_operand.vmem [shape: f32[1,128], index: 2, kind: input, shape index: {}]
  %s3 = inlined_call_operand.hbm [shape: bf16[128,128], index: 3, kind: input, shape index: {}]
  %s4 = inlined_call_operand.vmem [shape: f32[1,128], index: 4, kind: input, shape index: {}]
  %s5 = inlined_call_operand.hbm [shape: bf16[128,128], index: 5, kind: input, shape index: {}]
  %s6 = inlined_call_operand.vmem [shape: f32[1,128], index: 6, kind: input, shape index: {}]
  %s7 = inlined_call_operand.hbm [shape: f32[8,128], index: 7, kind: output, shape index: {}]
  %s8 = sld [smem:[#allocation0]]
  $region54: #{tpu_custom_call.1} parent=0
    _
  %s10 = ssub.s32 1, %s8
  %s11 = scalar_select 0, %s10, %s8
  $region1: #{tpu_custom_call.1} parent=0
    #allocation2 [shape = 'u8[4096]{0}', space=vmem, size = 0x1000, scoped, tag = 'input window, operand 0, single buffered']
    #allocation3 [shape = 's32[1]{0}', space=sflag, size = 0x4, scoped, tag = 'scoped memory for tpu_custom_call.1']
    #allocation4 [shape = 's32[1]{0}', space=sflag, size = 0x4, scoped, tag = 'scoped memory for tpu_custom_call.1']
    #allocation5 [shape = 'u8[2048]{0}', space=vmem, size = 0x800, scoped, tag = 'input window, operand 1, single buffered']
    #allocation6 [shape = 's32[1]{0}', space=sflag, size = 0x4, scoped, tag = 'scoped memory for tpu_custom_call.1']
    #allocation7 [shape = 'u8[32768]{0}', space=vmem, size = 0x8000, scoped, tag = 'input window, operand 3, single buffered']
    #allocation8 [shape = 'u8[32768]{0}', space=vmem, size = 0x8000, scoped, tag = 'input window, operand 5, single buffered']
    #allocation9 [shape = 's32[1]{0}', space=sflag, size = 0x4, scoped, tag = 'scoped memory for tpu_custom_call.1']
    #allocation10 [shape = 'u8[4096]{0}', space=vmem, size = 0x1000, scoped, tag = 'output window, operand 0, single buffered']
    %12 = vsyncpa [#allocation3], 0
    %13 = vsyncpa [#allocation6], 0
    %14 = vsyncpa [#allocation9], 0
    %15 = vsyncpa [#allocation4], 0
    // Predicated region
    $region2: #{tpu_custom_call.1} parent=1 // pred_check
      _
    $region3: #{tpu_custom_call.1} parent=1 // pred_check_branch
      %17 = sbr.rel (0) target = $region5
    $region4: #{tpu_custom_call.1} parent=1 // pred_region
      %s19 = ssub.s32 128, 128
      %20 = vsyncadd [#allocation3], %s19
      %s22 = sshll.u32 [#allocation2], 4
      %s23 = int_to_ptr.vmem [resolvable:$true] %s22
      %25 = dma.hbm_to_vmem [thread:$0]  %s0, 128, %s23, [#allocation3]
    $region5: #{tpu_custom_call.1} parent=1 // pred_fallthru
      _
    // Predicated region
    $region6: #{tpu_custom_call.1} parent=1 // pred_check
      _
    $region7: #{tpu_custom_call.1} parent=1 // pred_check_branch
      %27 = sbr.rel (0) target = $region9
    $region8: #{tpu_custom_call.1} parent=1 // pred_region
      %s29 = ssub.s32 64, 64
      %30 = vsyncadd [#allocation6], %s29
      %s32 = sshll.u32 [#allocation5], 4
      %s33 = int_to_ptr.vmem [resolvable:$true] %s32
      %35 = dma.hbm_to_vmem [thread:$0]  %s1, 64, %s33, [#allocation6]
    $region9: #{tpu_custom_call.1} parent=1 // pred_fallthru
      _
    // Predicated region
    $region10: #{tpu_custom_call.1} parent=1 // pred_check
      _
    $region11: #{tpu_custom_call.1} parent=1 // pred_check_branch
      %37 = sbr.rel (0) target = $region13
    $region12: #{tpu_custom_call.1} parent=1 // pred_region
      _
    $region13: #{tpu_custom_call.1} parent=1 // pred_fallthru
      _
    // Predicated region
    $region14: #{tpu_custom_call.1} parent=1 // pred_check
      _
    $region15: #{tpu_custom_call.1} parent=1 // pred_check_branch
      %39 = sbr.rel (0) target = $region17
    $region16: #{tpu_custom_call.1} parent=1 // pred_region
      %s41 = ssub.s32 1024, 1024
      %42 = vsyncadd [#allocation6], %s41
      %s43 = sshll.u32 [#allocation7], 4
      %s44 = int_to_ptr.vmem [resolvable:$true] %s43
      %49 = dma.hbm_to_vmem [thread:$0]  %s3, 1024, %s44, [#allocation6], 64, 64, 4
    $region17: #{tpu_custom_call.1} parent=1 // pred_fallthru
      _
    // Predicated region
    $region18: #{tpu_custom_call.1} parent=1 // pred_check
      _
    $region19: #{tpu_custom_call.1} parent=1 // pred_check_branch
      %51 = sbr.rel (0) target = $region21
    $region20: #{tpu_custom_call.1} parent=1 // pred_region
      _
    $region21: #{tpu_custom_call.1} parent=1 // pred_fallthru
      _
    // Predicated region
    $region22: #{tpu_custom_call.1} parent=1 // pred_check
      _
    $region23: #{tpu_custom_call.1} parent=1 // pred_check_branch
      %53 = sbr.rel (0) target = $region25
    $region24: #{tpu_custom_call.1} parent=1 // pred_region
      %s55 = ssub.s32 1024, 1024
      %56 = vsyncadd [#allocation9], %s55
      %s57 = sshll.u32 [#allocation8], 4
      %s58 = int_to_ptr.vmem [resolvable:$true] %s57
      %63 = dma.hbm_to_vmem [thread:$0]  %s5, 1024, %s58, [#allocation9], 64, 64, 4
    $region25: #{tpu_custom_call.1} parent=1 // pred_fallthru
      _
    // Predicated region
    $region26: #{tpu_custom_call.1} parent=1 // pred_check
      _
    $region27: #{tpu_custom_call.1} parent=1 // pred_check_branch
      %65 = sbr.rel (0) target = $region29
    $region28: #{tpu_custom_call.1} parent=1 // pred_region
      _
    $region29: #{tpu_custom_call.1} parent=1 // pred_fallthru
      _
    // Predicated region
    $region30: #{tpu_custom_call.1} parent=1 // pred_check
      _
    $region31: #{tpu_custom_call.1} parent=1 // pred_check_branch
      %67 = sbr.rel (0) target = $region33
    $region32: #{tpu_custom_call.1} parent=1 // pred_region
      %68 = dma.done [#allocation3], 128
    $region33: #{tpu_custom_call.1} parent=1 // pred_fallthru
      _
    // Predicated region
    $region34: #{tpu_custom_call.1} parent=1 // pred_check
      _
    $region35: #{tpu_custom_call.1} parent=1 // pred_check_branch
      %70 = sbr.rel (0) target = $region37
    $region36: #{tpu_custom_call.1} parent=1 // pred_region
      %71 = dma.done [#allocation6], 64
    $region37: #{tpu_custom_call.1} parent=1 // pred_fallthru
      _
    // Predicated region
    $region38: #{tpu_custom_call.1} parent=1 // pred_check
      _
    $region39: #{tpu_custom_call.1} parent=1 // pred_check_branch
      %73 = sbr.rel (0) target = $region41
    $region40: #{tpu_custom_call.1} parent=1 // pred_region
      %74 = dma.done [#allocation6], 1024
    $region41: #{tpu_custom_call.1} parent=1 // pred_fallthru
      _
    // Predicated region
    $region42: #{tpu_custom_call.1} parent=1 // pred_check
      _
    $region43: #{tpu_custom_call.1} parent=1 // pred_check_branch
      %76 = sbr.rel (0) target = $region45
    $region44: #{tpu_custom_call.1} parent=1 // pred_region
      %77 = dma.done [#allocation9], 1024
    $region45: #{tpu_custom_call.1} parent=1 // pred_fallthru
      _
    %v79 = vld [vmem:[#allocation2] sm:$0xff]
    %v80 = vld [vmem:[#allocation5] sm:$0xf]
    %v81 = vld [vmem:[%s2] sm:$0x1]
    %v83 = vlaneseq
    %v84 = vshrl.u32 %v83, 7
    %v85 = vsub.s32 0, %v84
    %v86 = vrot.slane %v81, %v85
    %vm88 = vcmask 64512
    %v90 = vsel %vm88, %v79, 0
    %vm92 = vcmask 1043456
    %v94 = vsel %vm92, %v80, 0
    %96 = vmatprep.subr.bf16.mxu0 0
    %97 = vmatpush1.bf16.msra.mxu0 0
    %98 = vmatprep.subr.bf16.mxu0 0
    %99 = vmatpush1.bf16.msra.mxu0 0
    %100 = vmatprep.subr.bf16.mxu0 0
    %101 = vmatpush1.bf16.msra.mxu0 0
    %102 = vmatprep.subr.bf16.mxu0 0
    %103 = vmatpush1.bf16.msra.mxu0 0
    %104 = vmatprep.subr.bf16.mxu0 0
    %105 = vmatpush1.bf16.msra.mxu0 0
    %106 = vmatprep.subr.bf16.mxu0 0
    %107 = vmatpush1.bf16.msra.mxu0 0
    %108 = vmatprep.subr.bf16.mxu0 0
    %109 = vmatpush1.bf16.msra.mxu0 0
    %110 = vmatprep.subr.bf16.mxu0 0
    %111 = vmatpush1.bf16.msra.mxu0 %v94
    %112 = vmatprep.subr.bf16.mxu0 0
    %113 = vmatpush2.bf16.msra.mxu0 0
    %114 = vmatprep.subr.bf16.mxu0 0
    %115 = vmatpush2.bf16.msra.mxu0 0
    %116 = vmatprep.subr.bf16.mxu0 0
    %117 = vmatpush2.bf16.msra.mxu0 0
    %118 = vmatprep.subr.bf16.mxu0 0
    %119 = vmatpush2.bf16.msra.mxu0 0
    %120 = vmatprep.subr.bf16.mxu0 0
    %121 = vmatpush2.bf16.msra.mxu0 0
    %122 = vmatprep.subr.bf16.mxu0 0
    %123 = vmatpush2.bf16.msra.mxu0 0
    %124 = vmatprep.subr.bf16.mxu0 0
    %125 = vmatpush2.bf16.msra.mxu0 0
    %126 = vmatprep.subr.bf16.mxu0 0
    %127 = vmatpush2.bf16.msra.mxu0 0
    %128 = vmatprep.mubr.f32.mxu0 0.0
    %129 = vmatmul.mubr.f32.gmra.mxu0 %v90
    %v130 = vpop.f32.mrf.mxu0
    %v131 = vadd.f32 %v86, %v130
    %v132 = vpop.f32.mrf.mxu0
    %133 = vdwg.mxu0
    %v134 = vmax.f32 %v131, 0.0
    %v135 = vpack.c.bf16 %v134, %v134
    %v136 = vld [vmem:[#allocation7] sm:$0xf]
    %v137 = vld [vmem:[#allocation7 + $0x4] sm:$0xf]
    %v138 = vld [vmem:[#allocation7 + $0x8] sm:$0xf]
    %v139 = vld [vmem:[#allocation7 + $0xc] sm:$0xf]
    %v140 = vld [vmem:[#allocation7 + $0x10] sm:$0xf]
    %v141 = vld [vmem:[#allocation7 + $0x14] sm:$0xf]
    %v142 = vld [vmem:[#allocation7 + $0x18] sm:$0xf]
    %v143 = vld [vmem:[#allocation7 + $0x1c] sm:$0xf]
    %v144 = vld [vmem:[#allocation7 + $0x20] sm:$0xf]
    %v145 = vld [vmem:[#allocation7 + $0x24] sm:$0xf]
    %v146 = vld [vmem:[#allocation7 + $0x28] sm:$0xf]
    %v147 = vld [vmem:[#allocation7 + $0x2c] sm:$0xf]
    %v148 = vld [vmem:[#allocation7 + $0x30] sm:$0xf]
    %v149 = vld [vmem:[#allocation7 + $0x34] sm:$0xf]
    %v150 = vld [vmem:[#allocation7 + $0x38] sm:$0xf]
    %v151 = vld [vmem:[#allocation7 + $0x3c] sm:$0xf]
    %v152 = vld [vmem:[%s4] sm:$0x1]
    %v154 = vlaneseq
    %v155 = vshrl.u32 %v154, 7
    %v156 = vsub.s32 0, %v155
    %v157 = vrot.slane %v152, %v156
    %v175 = vunpack.c.l.b16 %v136
    %v176 = vunpack.c.l.b16 %v137
    %v177 = vunpack.c.l.b16 %v138
    %v178 = vunpack.c.l.b16 %v139
    %v179 = vunpack.c.l.b16 %v140
    %v180 = vunpack.c.l.b16 %v141
    %v181 = vunpack.c.l.b16 %v142
    %v182 = vunpack.c.l.b16 %v143
    %v183 = vunpack.c.l.b16 %v144
    %v184 = vunpack.c.l.b16 %v145
    %v185 = vunpack.c.l.b16 %v146
    %v186 = vunpack.c.l.b16 %v147
    %v187 = vunpack.c.l.b16 %v148
    %v188 = vunpack.c.l.b16 %v149
    %v189 = vunpack.c.l.b16 %v150
    %v190 = vunpack.c.l.b16 %v151
    %v191 = vpack.c.b16 %v176, %v175
    %v192 = vpack.c.b16 %v178, %v177
    %v193 = vpack.c.b16 %v180, %v179
    %v194 = vpack.c.b16 %v182, %v181
    %v195 = vpack.c.b16 %v184, %v183
    %v196 = vpack.c.b16 %v186, %v185
    %v197 = vpack.c.b16 %v188, %v187
    %v198 = vpack.c.b16 %v190, %v189
    %207 = vmatprep.subr.bf16.mxu0 0
    %208 = vmatpush1.bf16.msra.mxu0 %v198
    %209 = vmatprep.subr.bf16.mxu0 0
    %210 = vmatpush1.bf16.msra.mxu0 %v197
    %211 = vmatprep.subr.bf16.mxu0 0
    %212 = vmatpush1.bf16.msra.mxu0 %v196
    %213 = vmatprep.subr.bf16.mxu0 0
    %214 = vmatpush1.bf16.msra.mxu0 %v195
    %215 = vmatprep.subr.bf16.mxu0 0
    %216 = vmatpush1.bf16.msra.mxu0 %v194
    %217 = vmatprep.subr.bf16.mxu0 0
    %218 = vmatpush1.bf16.msra.mxu0 %v193
    %219 = vmatprep.subr.bf16.mxu0 0
    %220 = vmatpush1.bf16.msra.mxu0 %v192
    %221 = vmatprep.subr.bf16.mxu0 0
    %222 = vmatpush1.bf16.msra.mxu0 %v191
    %223 = vmatprep.subr.bf16.mxu0 0
    %224 = vmatpush2.bf16.msra.mxu0 0
    %225 = vmatprep.subr.bf16.mxu0 0
    %226 = vmatpush2.bf16.msra.mxu0 0
    %227 = vmatprep.subr.bf16.mxu0 0
    %228 = vmatpush2.bf16.msra.mxu0 0
    %229 = vmatprep.subr.bf16.mxu0 0
    %230 = vmatpush2.bf16.msra.mxu0 0
    %231 = vmatprep.subr.bf16.mxu0 0
    %232 = vmatpush2.bf16.msra.mxu0 0
    %233 = vmatprep.subr.bf16.mxu0 0
    %234 = vmatpush2.bf16.msra.mxu0 0
    %235 = vmatprep.subr.bf16.mxu0 0
    %236 = vmatpush2.bf16.msra.mxu0 0
    %237 = vmatprep.subr.bf16.mxu0 0
    %238 = vmatpush2.bf16.msra.mxu0 0
    %239 = vmatprep.mubr.bf16.mxu0 0
    %240 = vmatmul.mubr.bf16.gmra.mxu0 %v135
    %v241 = vpop.f32.mrf.mxu0
    %v242 = vadd.f32 %v157, %v241
    %v243 = vpop.f32.mrf.mxu0
    %v244 = vpop.f32.mrf.mxu0
    %v245 = vpop.f32.mrf.mxu0
    %246 = vdwg.mxu0
    %v247 = vmax.f32 %v242, 0.0
    %v248 = vpack.c.bf16 %v247, %v247
    %v249 = vld [vmem:[#allocation8] sm:$0xf]
    %v250 = vld [vmem:[#allocation8 + $0x4] sm:$0xf]
    %v251 = vld [vmem:[#allocation8 + $0x8] sm:$0xf]
    %v252 = vld [vmem:[#allocation8 + $0xc] sm:$0xf]
    %v253 = vld [vmem:[#allocation8 + $0x10] sm:$0xf]
    %v254 = vld [vmem:[#allocation8 + $0x14] sm:$0xf]
    %v255 = vld [vmem:[#allocation8 + $0x18] sm:$0xf]
    %v256 = vld [vmem:[#allocation8 + $0x1c] sm:$0xf]
    %v257 = vld [vmem:[#allocation8 + $0x20] sm:$0xf]
    %v258 = vld [vmem:[#allocation8 + $0x24] sm:$0xf]
    %v259 = vld [vmem:[#allocation8 + $0x28] sm:$0xf]
    %v260 = vld [vmem:[#allocation8 + $0x2c] sm:$0xf]
    %v261 = vld [vmem:[#allocation8 + $0x30] sm:$0xf]
    %v262 = vld [vmem:[#allocation8 + $0x34] sm:$0xf]
    %v263 = vld [vmem:[#allocation8 + $0x38] sm:$0xf]
    %v264 = vld [vmem:[#allocation8 + $0x3c] sm:$0xf]
    %v265 = vld [vmem:[%s6] sm:$0x1]
    %v267 = vlaneseq
    %v268 = vshrl.u32 %v267, 7
    %v269 = vsub.s32 0, %v268
    %v270 = vrot.slane %v265, %v269
    %v288 = vunpack.c.l.b16 %v249
    %v289 = vunpack.c.l.b16 %v250
    %v290 = vunpack.c.l.b16 %v251
    %v291 = vunpack.c.l.b16 %v252
    %v292 = vunpack.c.l.b16 %v253
    %v293 = vunpack.c.l.b16 %v254
    %v294 = vunpack.c.l.b16 %v255
    %v295 = vunpack.c.l.b16 %v256
    %v296 = vunpack.c.l.b16 %v257
    %v297 = vunpack.c.l.b16 %v258
    %v298 = vunpack.c.l.b16 %v259
    %v299 = vunpack.c.l.b16 %v260
    %v300 = vunpack.c.l.b16 %v261
    %v301 = vunpack.c.l.b16 %v262
    %v302 = vunpack.c.l.b16 %v263
    %v303 = vunpack.c.l.b16 %v264
    %v304 = vpack.c.b16 %v289, %v288
    %v305 = vpack.c.b16 %v291, %v290
    %v306 = vpack.c.b16 %v293, %v292
    %v307 = vpack.c.b16 %v295, %v294
    %v308 = vpack.c.b16 %v297, %v296
    %v309 = vpack.c.b16 %v299, %v298
    %v310 = vpack.c.b16 %v301, %v300
    %v311 = vpack.c.b16 %v303, %v302
    %320 = vmatprep.subr.bf16.mxu0 0
    %321 = vmatpush1.bf16.msra.mxu0 %v311
    %322 = vmatprep.subr.bf16.mxu0 0
    %323 = vmatpush1.bf16.msra.mxu0 %v310
    %324 = vmatprep.subr.bf16.mxu0 0
    %325 = vmatpush1.bf16.msra.mxu0 %v309
    %326 = vmatprep.subr.bf16.mxu0 0
    %327 = vmatpush1.bf16.msra.mxu0 %v308
    %328 = vmatprep.subr.bf16.mxu0 0
    %329 = vmatpush1.bf16.msra.mxu0 %v307
    %330 = vmatprep.subr.bf16.mxu0 0
    %331 = vmatpush1.bf16.msra.mxu0 %v306
    %332 = vmatprep.subr.bf16.mxu0 0
    %333 = vmatpush1.bf16.msra.mxu0 %v305
    %334 = vmatprep.subr.bf16.mxu0 0
    %335 = vmatpush1.bf16.msra.mxu0 %v304
    %336 = vmatprep.subr.bf16.mxu0 0
    %337 = vmatpush2.bf16.msra.mxu0 0
    %338 = vmatprep.subr.bf16.mxu0 0
    %339 = vmatpush2.bf16.msra.mxu0 0
    %340 = vmatprep.subr.bf16.mxu0 0
    %341 = vmatpush2.bf16.msra.mxu0 0
    %342 = vmatprep.subr.bf16.mxu0 0
    %343 = vmatpush2.bf16.msra.mxu0 0
    %344 = vmatprep.subr.bf16.mxu0 0
    %345 = vmatpush2.bf16.msra.mxu0 0
    %346 = vmatprep.subr.bf16.mxu0 0
    %347 = vmatpush2.bf16.msra.mxu0 0
    %348 = vmatprep.subr.bf16.mxu0 0
    %349 = vmatpush2.bf16.msra.mxu0 0
    %350 = vmatprep.subr.bf16.mxu0 0
    %351 = vmatpush2.bf16.msra.mxu0 0
    %352 = vmatprep.mubr.bf16.mxu0 0
    %353 = vmatmul.mubr.bf16.gmra.mxu0 %v248
    %v354 = vpop.f32.mrf.mxu0
    %v355 = vadd.f32 %v270, %v354
    %v356 = vpop.f32.mrf.mxu0
    %v357 = vpop.f32.mrf.mxu0
    %v358 = vpop.f32.mrf.mxu0
    %359 = vdwg.mxu0
    %v360 = vtanh.pop %v355
    %361 = vst [vmem:[#allocation10] sm:$0xff] %v360
    // Predicated region
    $region46: #{tpu_custom_call.1} parent=1 // pred_check
      _
    $region47: #{tpu_custom_call.1} parent=1 // pred_check_branch
      %363 = sbr.rel (0) target = $region49
    $region48: #{tpu_custom_call.1} parent=1 // pred_region
      %s365 = ssub.s32 128, 128
      %366 = vsyncadd [#allocation4], %s365
      %s368 = sshll.u32 [#allocation10], 4
      %s369 = int_to_ptr.vmem [resolvable:$true] %s368
      %371 = dma.vmem_to_hbm [thread:$0]  %s369, 128, %s7, [#allocation4]
    $region49: #{tpu_custom_call.1} parent=1 // pred_fallthru
      _
    // Predicated region
    $region50: #{tpu_custom_call.1} parent=1 // pred_check
      _
    $region51: #{tpu_custom_call.1} parent=1 // pred_check_branch
      %373 = sbr.rel (0) target = $region53
    $region52: #{tpu_custom_call.1} parent=1 // pred_region
      %374 = dma.done [#allocation4], 128
    $region53: #{tpu_custom_call.1} parent=1 // pred_fallthru
      _
    %375 = vsyncpa [#allocation3], 1
    %376 = vsyncpa [#allocation6], 1
    %377 = vsyncpa [#allocation9], 1
    %378 = vsyncpa [#allocation4], 1

</llo_original>
